<compile_context>
chip_gen: v6e
topology: v6e:2x2x1
jax: 0.10.0
libtpu: 0.0.40
codegen_flags: <defaults>
</compile_context>

<pallas_src>
import jax
import jax.numpy as jnp
from jax.experimental import pallas as pl
from jax.experimental.pallas import tpu as pltpu


# ---------------------------------------------------------------------------
# Pallas kernel: fused elementwise multiply with a pre-scaled broadcast mask.
# ---------------------------------------------------------------------------
def _masked_scale_kernel(x_ref, mask_ref, o_ref):
    # x_ref:    (tile_n, tile_f) tile in VMEM
    # mask_ref: (1, tile_f) pre-scaled mask tile in VMEM (broadcast over rows)
    # o_ref:    (tile_n, tile_f)
    o_ref[...] = x_ref[...] * mask_ref[...]


def _round_up(x, m):
    return ((x + m - 1) // m) * m


def _default_target_block_bytes():
    """~4 MiB blocks by default; slightly larger on v7x (faster HBM, shorter steps)."""
    target = 4 << 20
    try:
        info = pltpu.get_tpu_info()
        # v7x has 64 MiB VMEM/TC and ~3.2 TB/s HBM -> bigger blocks amortize
        # per-step overhead better; v5e/v6e report 128 MiB and keep 4 MiB.
        if getattr(info, "vmem_capacity_bytes", 128 << 20) <= (64 << 20):
            target = 6 << 20
    except Exception:
        pass
    return target


def _choose_tiles(n_rows, n_cols, itemsize, target_bytes):
    """Pick (tile_n, tile_f): tile_f a multiple of 128 (or full), tile_n a
    multiple of the dtype's packed sublane count (or full)."""
    sublane = max(8, 32 // max(1, itemsize))  # 8 f32, 16 bf16, 32 int8/fp8
    row_bytes = n_cols * itemsize

    if row_bytes * sublane <= target_bytes:
        # Full-width rows fit: tile only over rows.
        tile_f = n_cols
        rows = max(1, target_bytes // max(1, row_bytes))
        if rows >= n_rows:
            tile_n = n_rows
        else:
            tile_n = max(sublane, (rows // sublane) * sublane)
            tile_n = min(tile_n, n_rows)
    else:
        # Very wide rows (flattened conv activations): tile the feature dim too.
        tile_n = min(sublane, n_rows)
        cols = max(1, target_bytes // max(1, tile_n * itemsize))
        tile_f = max(128, (cols // 128) * 128)
        tile_f = min(tile_f, n_cols)

    # Prefer >= 2 row blocks so the "parallel" axis can feed both TensorCores
    # on v7x (harmless on single-TC chips; skipped for tiny inputs).
    if tile_n == n_rows and n_rows >= 2 * sublane:
        tile_n = min(n_rows, _round_up(-(-n_rows // 2), sublane))

    return tile_n, tile_f


def _apply_rowwise_mask(x2d, scaled_mask_row, donate_input=False):
    """x2d: (N, F); scaled_mask_row: (1, F_pad) already scaled by 1/(1-p) and
    zero-padded to F_pad = round_up(F, 128)."""
    N, F = x2d.shape
    Fp = scaled_mask_row.shape[1]
    itemsize = jnp.dtype(x2d.dtype).itemsize

    needs_pad = Fp != F
    x_in = jnp.pad(x2d, ((0, 0), (0, Fp - F))) if needs_pad else x2d
    # TODO(synk): for very small F at huge N, folding rows into lanes instead
    # of padding would avoid the extra pad/slice HBM traffic.

    target_bytes = _default_target_block_bytes()
    tile_n, tile_f = _choose_tiles(N, Fp, itemsize, target_bytes)
    grid = (pl.cdiv(N, tile_n), pl.cdiv(Fp, tile_f))

    extra = {}
    if donate_input and not needs_pad:
        # Aliasing reuses x's HBM buffer for the output (saves the output
        # allocation); it does NOT reduce read/write bandwidth.
        extra["input_output_aliases"] = {0: 0}

    cost = pl.CostEstimate(
        flops=N * Fp,
        transcendentals=0,
        bytes_accessed=(2 * N * Fp + Fp) * itemsize,
    )

    y = pl.pallas_call(
        _masked_scale_kernel,
        out_shape=jax.ShapeDtypeStruct((N, Fp), x2d.dtype),
        grid=grid,
        in_specs=[
            pl.BlockSpec((tile_n, tile_f), lambda i, j: (i, j)),
            pl.BlockSpec((1, tile_f), lambda i, j: (0, j)),
        ],
        out_specs=pl.BlockSpec((tile_n, tile_f), lambda i, j: (i, j)),
        compiler_params=pltpu.CompilerParams(
            dimension_semantics=("parallel", "parallel"),
            vmem_limit_bytes=48 << 20,
        ),
        cost_estimate=cost,
        **extra,
    )(x_in, scaled_mask_row)

    return y[:, :F] if needs_pad else y


# ---------------------------------------------------------------------------
# Module-equivalent wrapper (mask_dict bookkeeping stays in plain Python/JAX).
# ---------------------------------------------------------------------------
class ConsistentMCDropoutMask:
    def __init__(self, p=0.8, seed=0):
        if p < 0 or p > 1:
            raise ValueError(
                "dropout probability has to be between 0 and 1, but got {}".format(p)
            )
        self.p = float(p)
        self.mask_dict = {}          # m -> mask in the PyTorch-equivalent shape
        self._scaled_row_cache = {}  # (m, dtype, shape, Fp) -> (1, Fp) scaled row
        self._key = jax.random.PRNGKey(seed)

    def _next_key(self):
        self._key, sub = jax.random.split(self._key)
        return sub

    def _create_mask(self, x, num):
        if x.ndim == 0:
            raise ValueError("Scalar inputs cannot be masked")
        elif x.ndim == 2:
            feature_mask = jax.random.bernoulli(
                self._next_key(), 1.0 - self.p, (x.shape[1],)
            ).astype(jnp.float32)
            mask = feature_mask.reshape(1, -1)
        elif x.ndim == 4:
            channel_mask = jax.random.bernoulli(
                self._next_key(), 1.0 - self.p, (x.shape[1],)
            ).astype(jnp.float32)
            mask = channel_mask.reshape(1, -1, 1, 1)
        else:
            raise ValueError(f"Unsupported input shape: {x.shape}")
        self.mask_dict[num] = mask
        return mask

    def _get_scaled_mask_row(self, x, m):
        """Pre-scaled (by 1/(1-p)), pre-broadcast, lane-padded (1, F_pad) row,
        cached per (mask id, dtype, trailing shape)."""
        if x.ndim == 4:
            F = x.shape[1] * x.shape[2] * x.shape[3]
        else:
            F = x.shape[1]
        Fp = _round_up(F, 128)
        cache_key = (m, str(jnp.dtype(x.dtype)), tuple(x.shape[1:]), Fp)
        row = self._scaled_row_cache.get(cache_key)
        if row is not None:
            return row

        mask = self.mask_dict[m]
        # p == 1 would make the scale infinite; the mask is all zeros anyway,
        # so return all zeros.  (Documented divergence: the literal PyTorch
        # expression input*mask/(1-p) would yield NaN/Inf here.)
        scale = 0.0 if self.p >= 1.0 else 1.0 / (1.0 - self.p)

        if x.ndim == 4:
            _, C, H, W = x.shape
            scaled = (mask.reshape(1, C, 1, 1).astype(jnp.float32) * scale).astype(
                x.dtype
            )
            row = jnp.broadcast_to(scaled, (1, C, H, W)).reshape(1, F)
        else:
            row = (mask.reshape(1, -1).astype(jnp.float32) * scale).astype(x.dtype)

        if Fp != F:
            row = jnp.pad(row, ((0, 0), (0, Fp - F)))

        self._scaled_row_cache[cache_key] = row
        return row

    def __call__(self, x, m, donate_input=False):
        if x.ndim not in (2, 4):
            raise ValueError(f"Unsupported input shape: {x.shape}")
        if m not in self.mask_dict:
            self._create_mask(x, m)
        row = self._get_scaled_mask_row(x, m)

        if x.ndim == 4:
            N, C, H, W = x.shape
            x2d = x.reshape(N, C * H * W)
            y2d = _apply_rowwise_mask(x2d, row, donate_input=donate_input)
            return y2d.reshape(N, C, H, W)
        else:
            return _apply_rowwise_mask(x, row, donate_input=donate_input)


if __name__ == "__main__":
    key = jax.random.PRNGKey(0)
    kx, k2 = jax.random.split(key)

    # 4D (conv-style, NCHW) input — the main path.
    x4 = jax.random.normal(kx, (2, 4, 16, 16), dtype=jnp.float32)
    dropout = ConsistentMCDropoutMask(p=0.5, seed=0)
    y4_a = dropout(x4, m=0)
    y4_b = dropout(x4, m=0)  # same mask id -> identical output (consistency)
    jax.block_until_ready(y4_a)
    jax.block_until_ready(y4_b)

    # Reference check in plain JAX.
    mask4 = dropout.mask_dict[0]
    ref4 = x4 * mask4 / (1.0 - dropout.p)
    assert jnp.allclose(y4_a, ref4, atol=1e-6)
    assert jnp.allclose(y4_a, y4_b)

    # 2D (fully-connected) input path — ragged F (32) exercises lane padding.
    x2 = jax.random.normal(k2, (8, 32), dtype=jnp.float32)
    y2 = dropout(x2, m=1)
    jax.block_until_ready(y2)
    mask2 = dropout.mask_dict[1]
    ref2 = x2 * mask2 / (1.0 - dropout.p)
    assert jnp.allclose(y2, ref2, atol=1e-6)

    print("KERNEL_OK")
</pallas_src>

<mosaic_0001>
module attributes {stable_mosaic.version = 11 : i64} {
  func.func @_masked_scale_kernel(%arg0: i32, %arg1: i32, %arg2: memref<2x1024xf32, #tpu.memory_space<vmem>>, %arg3: memref<1x1024xf32, #tpu.memory_space<vmem>>, %arg4: memref<2x1024xf32, #tpu.memory_space<vmem>>) attributes {dimension_semantics = [#tpu.dimension_semantics<parallel>, #tpu.dimension_semantics<parallel>], iteration_bounds = array<i64: 1, 1>, scalar_prefetch = 0 : i64, scratch_operands = 0 : i64, tpu.core_type = #tpu.core_type<tc>, window_params = [{transform_indices = @transform_0, window_bounds = array<i64: 2, 1024>}, {transform_indices = @transform_1, window_bounds = array<i64: 1, 1024>}, {transform_indices = @transform_2, window_bounds = array<i64: 2, 1024>}]} {
    %c0 = arith.constant 0 : index
    %c0_0 = arith.constant 0 : index
    %0 = vector.load %arg2[%c0, %c0_0] : memref<2x1024xf32, #tpu.memory_space<vmem>>, vector<2x1024xf32>
    %c0_1 = arith.constant 0 : index
    %c0_2 = arith.constant 0 : index
    %1 = vector.load %arg3[%c0_1, %c0_2] : memref<1x1024xf32, #tpu.memory_space<vmem>>, vector<1x1024xf32>
    %2 = vector.broadcast %1 : vector<1x1024xf32> to vector<2x1024xf32>
    %3 = arith.mulf %0, %2 : vector<2x1024xf32>
    %c0_3 = arith.constant 0 : index
    %c0_4 = arith.constant 0 : index
    %4 = vector.load %arg4[%c0_3, %c0_4] : memref<2x1024xf32, #tpu.memory_space<vmem>>, vector<2x1024xf32>
    tpu.vector_store %arg4[%c0_3, %c0_4], %3 {strides = array<i32>} : memref<2x1024xf32, #tpu.memory_space<vmem>>, vector<2x1024xf32>,
    return
  }
  func.func @transform_0(%arg0: i32, %arg1: i32) -> (i32, i32) {
    %c0_i32 = arith.constant 0 : i32
    return %arg0, %arg1 : i32, i32
  }
  func.func @transform_1(%arg0: i32, %arg1: i32) -> (i32, i32) {
    %c0_i32 = arith.constant 0 : i32
    %c0_i32_0 = arith.constant 0 : i32
    return %c0_i32, %arg1 : i32, i32
  }
  func.func @transform_2(%arg0: i32, %arg1: i32) -> (i32, i32) {
    %c0_i32 = arith.constant 0 : i32
    return %arg0, %arg1 : i32, i32
  }
}

</mosaic_0001>

<llo_original>
// kernel: tpu_custom_call.1
$region0: #{tpu_custom_call.1}
  #allocation0 [shape = 'u32[]', space=smem, size = 0x4, offset = 0x4, fixed_abs, tag = 'smem constant byte address 0x4 - core index']
  #allocation1 [shape = 'u32[144,128]{1,0:T(1,128)}', space=vmem, size = 0x12000, scoped, tag = 'internal scratch']
  %s0 = inlined_call_operand.hbm [shape: f32[2,1024], index: 0, kind: input, shape index: {}]
  %s1 = inlined_call_operand.hbm [shape: f32[1,1024], index: 1, kind: input, shape index: {}]
  %s2 = inlined_call_operand.hbm [shape: f32[2,1024], index: 2, kind: output, shape index: {}]
  %s3 = sld [smem:[#allocation0]]
  $region26: #{tpu_custom_call.1} parent=0
    _
  %s5 = ssub.s32 1, %s3
  %s6 = scalar_select 0, %s5, %s3
  $region1: #{tpu_custom_call.1} parent=0
    #allocation2 [shape = 'u8[8192]{0}', space=vmem, size = 0x2000, scoped, tag = 'input window, operand 0, single buffered']
    #allocation3 [shape = 's32[1]{0}', space=sflag, size = 0x4, scoped, tag = 'scoped memory for tpu_custom_call.1']
    #allocation4 [shape = 's32[1]{0}', space=sflag, size = 0x4, scoped, tag = 'scoped memory for tpu_custom_call.1']
    #allocation5 [shape = 'u8[4096]{0}', space=vmem, size = 0x1000, scoped, tag = 'input window, operand 1, single buffered']
    #allocation6 [shape = 's32[1]{0}', space=sflag, size = 0x4, scoped, tag = 'scoped memory for tpu_custom_call.1']
    #allocation7 [shape = 'u8[8192]{0}', space=vmem, size = 0x2000, scoped, tag = 'output window, operand 0, single buffered']
    %7 = vsyncpa [#allocation3], 0
    %8 = vsyncpa [#allocation6], 0
    %9 = vsyncpa [#allocation4], 0
    // Predicated region
    $region2: #{tpu_custom_call.1} parent=1 // pred_check
      _
    $region3: #{tpu_custom_call.1} parent=1 // pred_check_branch
      %11 = sbr.rel (0) target = $region5
    $region4: #{tpu_custom_call.1} parent=1 // pred_region
      %s13 = ssub.s32 256, 256
      %14 = vsyncadd [#allocation3], %s13
      %s16 = sshll.u32 [#allocation2], 4
      %s17 = int_to_ptr.vmem [resolvable:$true] %s16
      %19 = dma.hbm_to_vmem [thread:$0]  %s0, 256, %s17, [#allocation3]
    $region5: #{tpu_custom_call.1} parent=1 // pred_fallthru
      _
    // Predicated region
    $region6: #{tpu_custom_call.1} parent=1 // pred_check
      _
    $region7: #{tpu_custom_call.1} parent=1 // pred_check_branch
      %21 = sbr.rel (0) target = $region9
    $region8: #{tpu_custom_call.1} parent=1 // pred_region
      %s23 = ssub.s32 128, 128
      %24 = vsyncadd [#allocation6], %s23
      %s26 = sshll.u32 [#allocation5], 4
      %s27 = int_to_ptr.vmem [resolvable:$true] %s26
      %29 = dma.hbm_to_vmem [thread:$0]  %s1, 128, %s27, [#allocation6]
    $region9: #{tpu_custom_call.1} parent=1 // pred_fallthru
      _
    // Predicated region
    $region10: #{tpu_custom_call.1} parent=1 // pred_check
      _
    $region11: #{tpu_custom_call.1} parent=1 // pred_check_branch
      %31 = sbr.rel (0) target = $region13
    $region12: #{tpu_custom_call.1} parent=1 // pred_region
      %32 = dma.done [#allocation3], 256
    $region13: #{tpu_custom_call.1} parent=1 // pred_fallthru
      _
    // Predicated region
    $region14: #{tpu_custom_call.1} parent=1 // pred_check
      _
    $region15: #{tpu_custom_call.1} parent=1 // pred_check_branch
      %34 = sbr.rel (0) target = $region17
    $region16: #{tpu_custom_call.1} parent=1 // pred_region
      %35 = dma.done [#allocation6], 128
    $region17: #{tpu_custom_call.1} parent=1 // pred_fallthru
      _
    %v36 = vld [vmem:[#allocation2] sm:$0xff]
    %v37 = vld [vmem:[#allocation2 + $0x8] sm:$0xff]
    %v38 = vld [vmem:[#allocation5] sm:$0xff]
    %v40 = vlaneseq
    %v41 = vshrl.u32 %v40, 7
    %v42 = vsub.s32 0, %v41
    %v43 = vrot.slane %v38, %v42
    %v44 = vlaneseq
    %v45 = vshrl.u32 %v44, 7
    %v46 = vsub.s32 1, %v45
    %v47 = vrot.slane %v38, %v46
    %v48 = vlaneseq
    %v49 = vshrl.u32 %v48, 7
    %v50 = vsub.s32 2, %v49
    %v51 = vrot.slane %v38, %v50
    %v52 = vlaneseq
    %v53 = vshrl.u32 %v52, 7
    %v54 = vsub.s32 3, %v53
    %v55 = vrot.slane %v38, %v54
    %v56 = vlaneseq
    %v57 = vshrl.u32 %v56, 7
    %v58 = vsub.s32 4, %v57
    %v59 = vrot.slane %v38, %v58
    %v60 = vlaneseq
    %v61 = vshrl.u32 %v60, 7
    %v62 = vsub.s32 5, %v61
    %v63 = vrot.slane %v38, %v62
    %v64 = vlaneseq
    %v65 = vshrl.u32 %v64, 7
    %v66 = vsub.s32 6, %v65
    %v67 = vrot.slane %v38, %v66
    %v68 = vlaneseq
    %v69 = vshrl.u32 %v68, 7
    %v70 = vsub.s32 7, %v69
    %v71 = vrot.slane %v38, %v70
    %v72 = vcombine.low %v43, %v47
    %v73 = vcombine.low %v51, %v55
    %v75 = vunpack.c.l.s4 1983009808
    %v76 = vunpack.c.0.s8 %v75
    %v77 = vlaneseq
    %v78 = vshrl.u32 %v77, 7
    %v79 = vsub.s32 %v76, %v78
    %v80 = vrot.slane %v72, %v79
    %v82 = vunpack.c.l.s4 1983009808
    %v83 = vunpack.c.0.s8 %v82
    %v84 = vlaneseq
    %v85 = vshrl.u32 %v84, 7
    %v86 = vsub.s32 %v83, %v85
    %v87 = vrot.slane %v73, %v86
    %v88 = vcombine.low %v80, %v87
    %v89 = vcombine.low %v59, %v63
    %v90 = vcombine.low %v67, %v71
    %v92 = vunpack.c.l.s4 1983009808
    %v93 = vunpack.c.0.s8 %v92
    %v94 = vlaneseq
    %v95 = vshrl.u32 %v94, 7
    %v96 = vsub.s32 %v93, %v95
    %v97 = vrot.slane %v89, %v96
    %v99 = vunpack.c.l.s4 1983009808
    %v100 = vunpack.c.0.s8 %v99
    %v101 = vlaneseq
    %v102 = vshrl.u32 %v101, 7
    %v103 = vsub.s32 %v100, %v102
    %v104 = vrot.slane %v90, %v103
    %v105 = vcombine.low %v97, %v104
    %v108 = vmul.f32 %v36, %v88
    %v109 = vmul.f32 %v37, %v105
    %110 = vst [vmem:[#allocation7] sm:$0xff] %v108
    %111 = vst [vmem:[#allocation7 + $0x8] sm:$0xff] %v109
    // Predicated region
    $region18: #{tpu_custom_call.1} parent=1 // pred_check
      _
    $region19: #{tpu_custom_call.1} parent=1 // pred_check_branch
      %113 = sbr.rel (0) target = $region21
    $region20: #{tpu_custom_call.1} parent=1 // pred_region
      %s115 = ssub.s32 256, 256
      %116 = vsyncadd [#allocation4], %s115
      %s118 = sshll.u32 [#allocation7], 4
      %s119 = int_to_ptr.vmem [resolvable:$true] %s118
      %121 = dma.vmem_to_hbm [thread:$0]  %s119, 256, %s2, [#allocation4]
    $region21: #{tpu_custom_call.1} parent=1 // pred_fallthru
      _
    // Predicated region
    $region22: #{tpu_custom_call.1} parent=1 // pred_check
      _
    $region23: #{tpu_custom_call.1} parent=1 // pred_check_branch
      %123 = sbr.rel (0) target = $region25
    $region24: #{tpu_custom_call.1} parent=1 // pred_region
      %124 = dma.done [#allocation4], 256
    $region25: #{tpu_custom_call.1} parent=1 // pred_fallthru
      _
    %125 = vsyncpa [#allocation3], 1
    %126 = vsyncpa [#allocation6], 1
    %127 = vsyncpa [#allocation4], 1

</llo_original>
